<compile_context>
chip_gen: v6e
topology: v6e:2x2x1
jax: 0.10.0
libtpu: 0.0.40
codegen_flags: <defaults>
</compile_context>

<pallas_src>
from functools import partial

import jax
import jax.numpy as jnp
from jax.experimental import pallas as pl
from jax.experimental.pallas import tpu as pltpu


def _conv_block_kernel(x_ref, w_ref, b_ref, m_ref, o_ref, *, H, W, activation):
    # x_ref : (1, C, H*W)    one image, channels on sublanes, pixels on lanes
    # w_ref : (9, Cout, C)   folded per-tap weights (1x1 + BN scale folded in)
    # b_ref : (Cout, 1)      folded bias (3x3 bias via 1x1, 1x1 bias, BN bias)
    # m_ref : (9, 1, H*W)    0/1 border-validity masks per tap ("same" padding)
    # o_ref : (1, Cout, H*W)
    HW = H * W
    x = x_ref[0]                                      # (C, HW), f32
    cout = o_ref.shape[1]
    acc = jnp.zeros((cout, HW), jnp.float32)

    t = 0
    for ddy in (-1, 0, 1):
        for ddx in (-1, 0, 1):
            d = ddy * W + ddx
            if d == 0:
                xs = x                                # center tap: no shift/mask
            else:
                # shifted[:, p] == x[:, p + d]; wrapped positions zeroed by mask.
                xs = pltpu.roll(x, shift=(-d) % HW, axis=1) * m_ref[t]
            acc = acc + jnp.dot(w_ref[t], xs, preferred_element_type=jnp.float32)
            t += 1

    y = acc + b_ref[...]                              # folded bias (+ BN)
    if activation:
        y = jnp.maximum(y, 0.0)                       # ReLU
    o_ref[0] = y.astype(o_ref.dtype)


def conv_block(x_nchw, w3, b3, w1, b1, bn_gamma=None, bn_beta=None,
               bn_mean=None, bn_var=None, *, norm=True, activation=False,
               eps=1e-3):
    """ConvBlock forward.  x_nchw: (N, C, H, W); weights in PyTorch layouts:
       w3 (C,C,3,3), b3 (C,), w1 (Cout,C,1,1), b1 (Cout,), BN params (Cout,)."""
    N, C, H, W = x_nchw.shape
    Cout = w1.shape[0]
    HW = H * W

    # ---- host-side folding (weight preprocessing, exact f32 elementwise) ----
    w1m = w1[:, :, 0, 0]                                       # (Cout, C)
    if norm:
        s = bn_gamma / jnp.sqrt(bn_var + eps)                  # (Cout,)
        bb = bn_beta - bn_mean * s
    else:
        s = jnp.ones((Cout,), jnp.float32)
        bb = jnp.zeros((Cout,), jnp.float32)
    # W_eff[o,k,i,j] = s[o] * sum_c w1[o,c] * w3[c,k,i,j]
    w_eff = (w1m[:, :, None, None, None] * w3[None]).sum(axis=1)
    w_eff = w_eff * s[:, None, None, None]                     # (Cout, C, 3, 3)
    b_eff = s * (b1 + (w1m * b3[None, :]).sum(axis=1)) + bb    # (Cout,)

    w_taps = jnp.transpose(w_eff, (2, 3, 0, 1)).reshape(9, Cout, C)
    b_col = b_eff.reshape(Cout, 1)

    # 0/1 masks implementing the zero "same" border for each of the 9 taps.
    r = jnp.arange(HW, dtype=jnp.int32) // W
    c = jnp.arange(HW, dtype=jnp.int32) % W
    masks = []
    for ddy in (-1, 0, 1):
        for ddx in (-1, 0, 1):
            valid = (r + ddy >= 0) & (r + ddy < H) & (c + ddx >= 0) & (c + ddx < W)
            masks.append(valid.astype(jnp.float32))
    masks = jnp.stack(masks).reshape(9, 1, HW)

    # Contiguous merge of (H, W) -> HW; no transpose, no copy, no host pad.
    x_flat = x_nchw.reshape(N, C, HW)

    kernel = partial(_conv_block_kernel, H=H, W=W, activation=activation)
    out_flat = pl.pallas_call(
        kernel,
        out_shape=jax.ShapeDtypeStruct((N, Cout, HW), x_nchw.dtype),
        grid_spec=pltpu.PrefetchScalarGridSpec(
            num_scalar_prefetch=0,
            grid=(N,),
            in_specs=[
                pl.BlockSpec((1, C, HW), lambda n: (n, 0, 0)),
                pl.BlockSpec((9, Cout, C), lambda n: (0, 0, 0)),
                pl.BlockSpec((Cout, 1), lambda n: (0, 0)),
                pl.BlockSpec((9, 1, HW), lambda n: (0, 0, 0)),
            ],
            out_specs=pl.BlockSpec((1, Cout, HW), lambda n: (n, 0, 0)),
        ),
        compiler_params=pltpu.CompilerParams(dimension_semantics=("parallel",)),
    )(x_flat, w_taps, b_col, masks)
    return out_flat.reshape(N, Cout, H, W)


def reference_nchw(x, w3, b3, w1, b1, gamma, beta, mean, var, *,
                   norm=True, activation=False, eps=1e-3):
    """Pure-JAX (unfused) reference mirroring the PyTorch ConvBlock forward."""
    dn = ("NCHW", "OIHW", "NCHW")
    hp = jax.lax.Precision.HIGHEST
    y = jax.lax.conv_general_dilated(x, w3, (1, 1), ((1, 1), (1, 1)),
                                     dimension_numbers=dn, precision=hp)
    y = y + b3[None, :, None, None]
    y = jax.lax.conv_general_dilated(y, w1, (1, 1), "VALID",
                                     dimension_numbers=dn, precision=hp)
    y = y + b1[None, :, None, None]
    if norm:
        scale = gamma[None, :, None, None] / jnp.sqrt(var[None, :, None, None] + eps)
        y = (y - mean[None, :, None, None]) * scale + beta[None, :, None, None]
    if activation:
        y = jnp.maximum(y, 0.0)
    return y


if __name__ == "__main__":
    N, Cin, H, W = 2, 4, 16, 16
    Cout = 8  # ConvBlock(in_channels=4, out_channels=8)

    key = jax.random.PRNGKey(0)
    ks = jax.random.split(key, 9)
    x = jax.random.normal(ks[0], (N, Cin, H, W), jnp.float32)
    w3 = 0.1 * jax.random.normal(ks[1], (Cin, Cin, 3, 3), jnp.float32)    # cov3x3.weight
    b3 = 0.1 * jax.random.normal(ks[2], (Cin,), jnp.float32)              # cov3x3.bias
    w1 = 0.1 * jax.random.normal(ks[3], (Cout, Cin, 1, 1), jnp.float32)   # cov1x1.weight
    b1 = 0.1 * jax.random.normal(ks[4], (Cout,), jnp.float32)             # cov1x1.bias
    gamma = 1.0 + 0.1 * jax.random.normal(ks[5], (Cout,), jnp.float32)    # bn.weight
    beta = 0.1 * jax.random.normal(ks[6], (Cout,), jnp.float32)           # bn.bias
    mean = 0.1 * jax.random.normal(ks[7], (Cout,), jnp.float32)           # bn.running_mean
    var = 0.5 + jax.random.uniform(ks[8], (Cout,), jnp.float32)           # bn.running_var

    # Default config: norm=True, activation=False
    out = conv_block(x, w3, b3, w1, b1, gamma, beta, mean, var,
                     norm=True, activation=False)
    out = jax.block_until_ready(out)
    ref = reference_nchw(x, w3, b3, w1, b1, gamma, beta, mean, var,
                         norm=True, activation=False)
    assert out.shape == (N, Cout, H, W), out.shape
    err = float(jnp.max(jnp.abs(out - ref)))
    assert err < 1e-4, f"max abs error {err}"

    # Also exercise the activation=True (ReLU) branch.
    out2 = conv_block(x, w3, b3, w1, b1, gamma, beta, mean, var,
                      norm=True, activation=True)
    out2 = jax.block_until_ready(out2)
    ref2 = reference_nchw(x, w3, b3, w1, b1, gamma, beta, mean, var,
                          norm=True, activation=True)
    err2 = float(jnp.max(jnp.abs(out2 - ref2)))
    assert err2 < 1e-4, f"max abs error (relu) {err2}"

    print("KERNEL_OK")
</pallas_src>

<mosaic_0001>
module attributes {stable_mosaic.version = 11 : i64} {
  func.func @_conv_block_kernel(%arg0: i32, %arg1: memref<1x4x256xf32, #tpu.memory_space<vmem>>, %arg2: memref<9x8x4xf32, #tpu.memory_space<vmem>>, %arg3: memref<8x1xf32, #tpu.memory_space<vmem>>, %arg4: memref<9x1x256xf32, #tpu.memory_space<vmem>>, %arg5: memref<1x8x256xf32, #tpu.memory_space<vmem>>) attributes {dimension_semantics = [#tpu.dimension_semantics<parallel>], iteration_bounds = array<i64: 2>, scalar_prefetch = 0 : i64, scratch_operands = 0 : i64, tpu.core_type = #tpu.core_type<tc>, window_params = [{transform_indices = @transform_0, window_bounds = array<i64: 1, 4, 256>}, {pipeline_mode = #tpu.pipeline_mode<synchronous>, transform_indices = @transform_1, window_bounds = array<i64: 9, 8, 4>}, {pipeline_mode = #tpu.pipeline_mode<synchronous>, transform_indices = @transform_2, window_bounds = array<i64: 8, 1>}, {pipeline_mode = #tpu.pipeline_mode<synchronous>, transform_indices = @transform_3, window_bounds = array<i64: 9, 1, 256>}, {transform_indices = @transform_4, window_bounds = array<i64: 1, 8, 256>}]} {
    %c0 = arith.constant 0 : index
    %c0_0 = arith.constant 0 : index
    %c0_1 = arith.constant 0 : index
    %0 = vector.load %arg1[%c0, %c0_0, %c0_1] : memref<1x4x256xf32, #tpu.memory_space<vmem>>, vector<1x4x256xf32>
    %1 = vector.shape_cast %0 : vector<1x4x256xf32> to vector<4x256xf32>
    %cst = arith.constant 0.000000e+00 : f32
    %2 = vector.broadcast %cst : f32 to vector<8x256xf32>
    %c17_i32 = arith.constant 17 : i32
    %3 = tpu.dynamic_rotate %1 by %c17_i32 dim 1 : vector<4x256xf32>, i32 -> vector<4x256xf32>
    %c0_2 = arith.constant 0 : index
    %c0_3 = arith.constant 0 : index
    %c0_4 = arith.constant 0 : index
    %4 = vector.load %arg4[%c0_2, %c0_3, %c0_4] : memref<9x1x256xf32, #tpu.memory_space<vmem>>, vector<1x1x256xf32>
    %5 = vector.shape_cast %4 : vector<1x1x256xf32> to vector<1x256xf32>
    %6 = vector.broadcast %5 : vector<1x256xf32> to vector<4x256xf32>
    %7 = arith.mulf %3, %6 : vector<4x256xf32>
    %c0_5 = arith.constant 0 : index
    %c0_6 = arith.constant 0 : index
    %c0_7 = arith.constant 0 : index
    %8 = vector.load %arg2[%c0_5, %c0_6, %c0_7] : memref<9x8x4xf32, #tpu.memory_space<vmem>>, vector<1x8x4xf32>
    %9 = vector.shape_cast %8 : vector<1x8x4xf32> to vector<8x4xf32>
    %cst_8 = arith.constant dense<0.000000e+00> : vector<8x256xf32>
    %10 = tpu.matmul %9, %7, %cst_8 {dimension_numbers = #tpu.dot_dimension_numbers<[1], [0], [0], [1], [0, 0, 1, 1], [], []>} : vector<8x4xf32>, vector<4x256xf32>, vector<8x256xf32> -> vector<8x256xf32>
    %11 = arith.addf %2, %10 : vector<8x256xf32>
    %c16_i32 = arith.constant 16 : i32
    %12 = tpu.dynamic_rotate %1 by %c16_i32 dim 1 : vector<4x256xf32>, i32 -> vector<4x256xf32>
    %c1 = arith.constant 1 : index
    %c0_9 = arith.constant 0 : index
    %c0_10 = arith.constant 0 : index
    %13 = vector.load %arg4[%c1, %c0_9, %c0_10] : memref<9x1x256xf32, #tpu.memory_space<vmem>>, vector<1x1x256xf32>
    %14 = vector.shape_cast %13 : vector<1x1x256xf32> to vector<1x256xf32>
    %15 = vector.broadcast %14 : vector<1x256xf32> to vector<4x256xf32>
    %16 = arith.mulf %12, %15 : vector<4x256xf32>
    %c1_11 = arith.constant 1 : index
    %c0_12 = arith.constant 0 : index
    %c0_13 = arith.constant 0 : index
    %17 = vector.load %arg2[%c1_11, %c0_12, %c0_13] : memref<9x8x4xf32, #tpu.memory_space<vmem>>, vector<1x8x4xf32>
    %18 = vector.shape_cast %17 : vector<1x8x4xf32> to vector<8x4xf32>
    %cst_14 = arith.constant dense<0.000000e+00> : vector<8x256xf32>
    %19 = tpu.matmul %18, %16, %cst_14 {dimension_numbers = #tpu.dot_dimension_numbers<[1], [0], [0], [1], [0, 0, 1, 1], [], []>} : vector<8x4xf32>, vector<4x256xf32>, vector<8x256xf32> -> vector<8x256xf32>
    %20 = arith.addf %11, %19 : vector<8x256xf32>
    %c15_i32 = arith.constant 15 : i32
    %21 = tpu.dynamic_rotate %1 by %c15_i32 dim 1 : vector<4x256xf32>, i32 -> vector<4x256xf32>
    %c2 = arith.constant 2 : index
    %c0_15 = arith.constant 0 : index
    %c0_16 = arith.constant 0 : index
    %22 = vector.load %arg4[%c2, %c0_15, %c0_16] : memref<9x1x256xf32, #tpu.memory_space<vmem>>, vector<1x1x256xf32>
    %23 = vector.shape_cast %22 : vector<1x1x256xf32> to vector<1x256xf32>
    %24 = vector.broadcast %23 : vector<1x256xf32> to vector<4x256xf32>
    %25 = arith.mulf %21, %24 : vector<4x256xf32>
    %c2_17 = arith.constant 2 : index
    %c0_18 = arith.constant 0 : index
    %c0_19 = arith.constant 0 : index
    %26 = vector.load %arg2[%c2_17, %c0_18, %c0_19] : memref<9x8x4xf32, #tpu.memory_space<vmem>>, vector<1x8x4xf32>
    %27 = vector.shape_cast %26 : vector<1x8x4xf32> to vector<8x4xf32>
    %cst_20 = arith.constant dense<0.000000e+00> : vector<8x256xf32>
    %28 = tpu.matmul %27, %25, %cst_20 {dimension_numbers = #tpu.dot_dimension_numbers<[1], [0], [0], [1], [0, 0, 1, 1], [], []>} : vector<8x4xf32>, vector<4x256xf32>, vector<8x256xf32> -> vector<8x256xf32>
    %29 = arith.addf %20, %28 : vector<8x256xf32>
    %c1_i32 = arith.constant 1 : i32
    %30 = tpu.dynamic_rotate %1 by %c1_i32 dim 1 : vector<4x256xf32>, i32 -> vector<4x256xf32>
    %c3 = arith.constant 3 : index
    %c0_21 = arith.constant 0 : index
    %c0_22 = arith.constant 0 : index
    %31 = vector.load %arg4[%c3, %c0_21, %c0_22] : memref<9x1x256xf32, #tpu.memory_space<vmem>>, vector<1x1x256xf32>
    %32 = vector.shape_cast %31 : vector<1x1x256xf32> to vector<1x256xf32>
    %33 = vector.broadcast %32 : vector<1x256xf32> to vector<4x256xf32>
    %34 = arith.mulf %30, %33 : vector<4x256xf32>
    %c3_23 = arith.constant 3 : index
    %c0_24 = arith.constant 0 : index
    %c0_25 = arith.constant 0 : index
    %35 = vector.load %arg2[%c3_23, %c0_24, %c0_25] : memref<9x8x4xf32, #tpu.memory_space<vmem>>, vector<1x8x4xf32>
    %36 = vector.shape_cast %35 : vector<1x8x4xf32> to vector<8x4xf32>
    %cst_26 = arith.constant dense<0.000000e+00> : vector<8x256xf32>
    %37 = tpu.matmul %36, %34, %cst_26 {dimension_numbers = #tpu.dot_dimension_numbers<[1], [0], [0], [1], [0, 0, 1, 1], [], []>} : vector<8x4xf32>, vector<4x256xf32>, vector<8x256xf32> -> vector<8x256xf32>
    %38 = arith.addf %29, %37 : vector<8x256xf32>
    %c4 = arith.constant 4 : index
    %c0_27 = arith.constant 0 : index
    %c0_28 = arith.constant 0 : index
    %39 = vector.load %arg2[%c4, %c0_27, %c0_28] : memref<9x8x4xf32, #tpu.memory_space<vmem>>, vector<1x8x4xf32>
    %40 = vector.shape_cast %39 : vector<1x8x4xf32> to vector<8x4xf32>
    %cst_29 = arith.constant dense<0.000000e+00> : vector<8x256xf32>
    %41 = tpu.matmul %40, %1, %cst_29 {dimension_numbers = #tpu.dot_dimension_numbers<[1], [0], [0], [1], [0, 0, 1, 1], [], []>} : vector<8x4xf32>, vector<4x256xf32>, vector<8x256xf32> -> vector<8x256xf32>
    %42 = arith.addf %38, %41 : vector<8x256xf32>
    %c255_i32 = arith.constant 255 : i32
    %43 = tpu.dynamic_rotate %1 by %c255_i32 dim 1 : vector<4x256xf32>, i32 -> vector<4x256xf32>
    %c5 = arith.constant 5 : index
    %c0_30 = arith.constant 0 : index
    %c0_31 = arith.constant 0 : index
    %44 = vector.load %arg4[%c5, %c0_30, %c0_31] : memref<9x1x256xf32, #tpu.memory_space<vmem>>, vector<1x1x256xf32>
    %45 = vector.shape_cast %44 : vector<1x1x256xf32> to vector<1x256xf32>
    %46 = vector.broadcast %45 : vector<1x256xf32> to vector<4x256xf32>
    %47 = arith.mulf %43, %46 : vector<4x256xf32>
    %c5_32 = arith.constant 5 : index
    %c0_33 = arith.constant 0 : index
    %c0_34 = arith.constant 0 : index
    %48 = vector.load %arg2[%c5_32, %c0_33, %c0_34] : memref<9x8x4xf32, #tpu.memory_space<vmem>>, vector<1x8x4xf32>
    %49 = vector.shape_cast %48 : vector<1x8x4xf32> to vector<8x4xf32>
    %cst_35 = arith.constant dense<0.000000e+00> : vector<8x256xf32>
    %50 = tpu.matmul %49, %47, %cst_35 {dimension_numbers = #tpu.dot_dimension_numbers<[1], [0], [0], [1], [0, 0, 1, 1], [], []>} : vector<8x4xf32>, vector<4x256xf32>, vector<8x256xf32> -> vector<8x256xf32>
    %51 = arith.addf %42, %50 : vector<8x256xf32>
    %c241_i32 = arith.constant 241 : i32
    %52 = tpu.dynamic_rotate %1 by %c241_i32 dim 1 : vector<4x256xf32>, i32 -> vector<4x256xf32>
    %c6 = arith.constant 6 : index
    %c0_36 = arith.constant 0 : index
    %c0_37 = arith.constant 0 : index
    %53 = vector.load %arg4[%c6, %c0_36, %c0_37] : memref<9x1x256xf32, #tpu.memory_space<vmem>>, vector<1x1x256xf32>
    %54 = vector.shape_cast %53 : vector<1x1x256xf32> to vector<1x256xf32>
    %55 = vector.broadcast %54 : vector<1x256xf32> to vector<4x256xf32>
    %56 = arith.mulf %52, %55 : vector<4x256xf32>
    %c6_38 = arith.constant 6 : index
    %c0_39 = arith.constant 0 : index
    %c0_40 = arith.constant 0 : index
    %57 = vector.load %arg2[%c6_38, %c0_39, %c0_40] : memref<9x8x4xf32, #tpu.memory_space<vmem>>, vector<1x8x4xf32>
    %58 = vector.shape_cast %57 : vector<1x8x4xf32> to vector<8x4xf32>
    %cst_41 = arith.constant dense<0.000000e+00> : vector<8x256xf32>
    %59 = tpu.matmul %58, %56, %cst_41 {dimension_numbers = #tpu.dot_dimension_numbers<[1], [0], [0], [1], [0, 0, 1, 1], [], []>} : vector<8x4xf32>, vector<4x256xf32>, vector<8x256xf32> -> vector<8x256xf32>
    %60 = arith.addf %51, %59 : vector<8x256xf32>
    %c240_i32 = arith.constant 240 : i32
    %61 = tpu.dynamic_rotate %1 by %c240_i32 dim 1 : vector<4x256xf32>, i32 -> vector<4x256xf32>
    %c7 = arith.constant 7 : index
    %c0_42 = arith.constant 0 : index
    %c0_43 = arith.constant 0 : index
    %62 = vector.load %arg4[%c7, %c0_42, %c0_43] : memref<9x1x256xf32, #tpu.memory_space<vmem>>, vector<1x1x256xf32>
    %63 = vector.shape_cast %62 : vector<1x1x256xf32> to vector<1x256xf32>
    %64 = vector.broadcast %63 : vector<1x256xf32> to vector<4x256xf32>
    %65 = arith.mulf %61, %64 : vector<4x256xf32>
    %c7_44 = arith.constant 7 : index
    %c0_45 = arith.constant 0 : index
    %c0_46 = arith.constant 0 : index
    %66 = vector.load %arg2[%c7_44, %c0_45, %c0_46] : memref<9x8x4xf32, #tpu.memory_space<vmem>>, vector<1x8x4xf32>
    %67 = vector.shape_cast %66 : vector<1x8x4xf32> to vector<8x4xf32>
    %cst_47 = arith.constant dense<0.000000e+00> : vector<8x256xf32>
    %68 = tpu.matmul %67, %65, %cst_47 {dimension_numbers = #tpu.dot_dimension_numbers<[1], [0], [0], [1], [0, 0, 1, 1], [], []>} : vector<8x4xf32>, vector<4x256xf32>, vector<8x256xf32> -> vector<8x256xf32>
    %69 = arith.addf %60, %68 : vector<8x256xf32>
    %c239_i32 = arith.constant 239 : i32
    %70 = tpu.dynamic_rotate %1 by %c239_i32 dim 1 : vector<4x256xf32>, i32 -> vector<4x256xf32>
    %c8 = arith.constant 8 : index
    %c0_48 = arith.constant 0 : index
    %c0_49 = arith.constant 0 : index
    %71 = vector.load %arg4[%c8, %c0_48, %c0_49] : memref<9x1x256xf32, #tpu.memory_space<vmem>>, vector<1x1x256xf32>
    %72 = vector.shape_cast %71 : vector<1x1x256xf32> to vector<1x256xf32>
    %73 = vector.broadcast %72 : vector<1x256xf32> to vector<4x256xf32>
    %74 = arith.mulf %70, %73 : vector<4x256xf32>
    %c8_50 = arith.constant 8 : index
    %c0_51 = arith.constant 0 : index
    %c0_52 = arith.constant 0 : index
    %75 = vector.load %arg2[%c8_50, %c0_51, %c0_52] : memref<9x8x4xf32, #tpu.memory_space<vmem>>, vector<1x8x4xf32>
    %76 = vector.shape_cast %75 : vector<1x8x4xf32> to vector<8x4xf32>
    %cst_53 = arith.constant dense<0.000000e+00> : vector<8x256xf32>
    %77 = tpu.matmul %76, %74, %cst_53 {dimension_numbers = #tpu.dot_dimension_numbers<[1], [0], [0], [1], [0, 0, 1, 1], [], []>} : vector<8x4xf32>, vector<4x256xf32>, vector<8x256xf32> -> vector<8x256xf32>
    %78 = arith.addf %69, %77 : vector<8x256xf32>
    %c0_54 = arith.constant 0 : index
    %c0_55 = arith.constant 0 : index
    %79 = vector.load %arg3[%c0_54, %c0_55] : memref<8x1xf32, #tpu.memory_space<vmem>>, vector<8x1xf32>
    %80 = vector.broadcast %79 : vector<8x1xf32> to vector<8x256xf32>
    %81 = arith.addf %78, %80 : vector<8x256xf32>
    %c0_56 = arith.constant 0 : index
    %c0_57 = arith.constant 0 : index
    %c0_58 = arith.constant 0 : index
    %82 = vector.load %arg5[%c0_56, %c0_57, %c0_58] : memref<1x8x256xf32, #tpu.memory_space<vmem>>, vector<1x8x256xf32>
    %83 = vector.shape_cast %82 : vector<1x8x256xf32> to vector<8x256xf32>
    %84 = vector.shape_cast %81 : vector<8x256xf32> to vector<1x8x256xf32>
    tpu.vector_store %arg5[%c0_56, %c0_57, %c0_58], %84 {strides = array<i32>} : memref<1x8x256xf32, #tpu.memory_space<vmem>>, vector<1x8x256xf32>,
    return
  }
  func.func @transform_0(%arg0: i32) -> (i32, i32, i32) {
    %c0_i32 = arith.constant 0 : i32
    %c0_i32_0 = arith.constant 0 : i32
    %c0_i32_1 = arith.constant 0 : i32
    return %arg0, %c0_i32, %c0_i32_0 : i32, i32, i32
  }
  func.func @transform_1(%arg0: i32) -> (i32, i32, i32) {
    %c0_i32 = arith.constant 0 : i32
    %c0_i32_0 = arith.constant 0 : i32
    %c0_i32_1 = arith.constant 0 : i32
    %c0_i32_2 = arith.constant 0 : i32
    return %c0_i32, %c0_i32_0, %c0_i32_1 : i32, i32, i32
  }
  func.func @transform_2(%arg0: i32) -> (i32, i32) {
    %c0_i32 = arith.constant 0 : i32
    %c0_i32_0 = arith.constant 0 : i32
    %c0_i32_1 = arith.constant 0 : i32
    return %c0_i32, %c0_i32_0 : i32, i32
  }
  func.func @transform_3(%arg0: i32) -> (i32, i32, i32) {
    %c0_i32 = arith.constant 0 : i32
    %c0_i32_0 = arith.constant 0 : i32
    %c0_i32_1 = arith.constant 0 : i32
    %c0_i32_2 = arith.constant 0 : i32
    return %c0_i32, %c0_i32_0, %c0_i32_1 : i32, i32, i32
  }
  func.func @transform_4(%arg0: i32) -> (i32, i32, i32) {
    %c0_i32 = arith.constant 0 : i32
    %c0_i32_0 = arith.constant 0 : i32
    %c0_i32_1 = arith.constant 0 : i32
    return %arg0, %c0_i32, %c0_i32_0 : i32, i32, i32
  }
}

</mosaic_0001>

<llo_original>
// kernel: tpu_custom_call.1
$region0: #{tpu_custom_call.1}
  #allocation0 [shape = 'u32[]', space=smem, size = 0x4, offset = 0x4, fixed_abs, tag = 'smem constant byte address 0x4 - core index']
  #allocation1 [shape = 'u32[144,128]{1,0:T(1,128)}', space=vmem, size = 0x12000, scoped, tag = 'internal scratch']
  %s0 = inlined_call_operand.vmem [shape: f32[2,4,256], index: 0, kind: input, shape index: {}]
  %s1 = inlined_call_operand.vmem [shape: f32[9,8,4], index: 1, kind: input, shape index: {}]
  %s2 = inlined_call_operand.vmem [shape: f32[8,1], index: 2, kind: input, shape index: {}]
  %s3 = inlined_call_operand.vmem [shape: f32[9,1,256], index: 3, kind: input, shape index: {}]
  %s4 = inlined_call_operand.hbm [shape: f32[2,8,256], index: 4, kind: output, shape index: {}]
  %s5 = sld [smem:[#allocation0]]
  $region49: #{tpu_custom_call.1} parent=0
    _
  %s7 = ssub.s32 1, %s5
  %s8 = scalar_select 0, %s7, %s5
  $region1: #{tpu_custom_call.1} parent=0
    #allocation2 [shape = 'u8[16384]{0}', space=vmem, size = 0x4000, scoped, tag = 'output window, operand 0']
    #allocation3 [shape = 's32[2]{0}', space=sflag, size = 0x8, scoped, tag = 'scoped memory for tpu_custom_call.1']
    %9 = vsyncpa [#allocation3], 0
    %s10 = scalar_lea.sflag [#allocation3], 1
    %11 = vsyncpa %s10, 0
    loop: start=0, step=1, limit=4
    $region2: #{tpu_custom_call.1} parent=1 // loop_pre_header
      _
    $region3: #{tpu_custom_call.1} parent=1 // loop_header
      %s13 = sphi 0, %s17
      %p14 = scmp.ge.s32.totalorder %s13, 4
      %s23 = sphi 0, %s25
      %s26 = sphi 0, %s23
      %s27 = sphi 0, %s26
      %s43 = sphi 0, %s27
      %s47 = sphi 0, %s47
      %s49 = sphi 0, %s47
      %s50 = sphi 0, %s49
      %s64 = sphi 0, %s50
      %s68 = sphi 0, %s68
      %s70 = sphi 0, %s68
      %s71 = sphi 0, %s70
      %s85 = sphi 0, %s71
      %s89 = sphi 0, %s89
      %s91 = sphi 0, %s89
      %s92 = sphi 0, %s91
      %s106 = sphi 0, %s92
      %s112 = sphi 0, %s114
      %s115 = sphi 0, %s112
      %s116 = sphi 0, %s115
      %s132 = sphi 0, %s116
    $region4: #{tpu_custom_call.1} parent=1 // loop_header_branch
      %16 = sbr.rel (%p14) target = $region8
    $region5: #{tpu_custom_call.1} parent=1 // loop_body
      %s18 = ssub.s32 %s13, 1
      %s19 = ssub.s32 %s13, 2
      %s20 = sadd.s32 %s13, 1
      %s21 = ssub.s32 %s13, %s20
      %p22 = scmp.eq.s32.totalorder %s21, 0
      %s24 = sadd.s32 %s23, 1
      %s25 = scalar_select %p22, %s23, %s24
      %p28 = pneg %p22
      %p29 = scmp.eq.s32.totalorder %s13, 1
      %p30 = por %p28, %p29
      %p31 = scmp.ne.s32.totalorder %s23, %s26
      %p32 = scmp.eq.s32.totalorder %s13, 0
      %p33 = por %p31, %p32
      %p34 = scmp.ne.s32.totalorder %s23, %s26
      %p35 = scmp.eq.s32.totalorder %s18, 1
      %p36 = por %p34, %p35
      %p37 = scmp.ne.s32.totalorder %s26, %s27
      %p38 = scmp.eq.s32.totalorder %s18, 0
      %p39 = por %p37, %p38
      %p40 = scmp.ne.s32.totalorder %s26, %s27
      %p41 = scmp.eq.s32.totalorder %s19, 1
      %p42 = por %p40, %p41
      %p44 = scmp.ne.s32.totalorder %s27, %s43
      %p45 = scmp.eq.s32.totalorder %s19, 0
      %p46 = por %p44, %p45
      %s48 = sadd.s32 %s47, 1
      %p51 = scmp.eq.s32.totalorder %s13, 1
      %p52 = scmp.ne.s32.totalorder %s47, %s49
      %p53 = scmp.eq.s32.totalorder %s13, 0
      %p54 = por %p52, %p53
      %p55 = scmp.ne.s32.totalorder %s47, %s49
      %p56 = scmp.eq.s32.totalorder %s18, 1
      %p57 = por %p55, %p56
      %p58 = scmp.ne.s32.totalorder %s49, %s50
      %p59 = scmp.eq.s32.totalorder %s18, 0
      %p60 = por %p58, %p59
      %p61 = scmp.ne.s32.totalorder %s49, %s50
      %p62 = scmp.eq.s32.totalorder %s19, 1
      %p63 = por %p61, %p62
      %p65 = scmp.ne.s32.totalorder %s50, %s64
      %p66 = scmp.eq.s32.totalorder %s19, 0
      %p67 = por %p65, %p66
      %s69 = sadd.s32 %s68, 1
      %p72 = scmp.eq.s32.totalorder %s13, 1
      %p73 = scmp.ne.s32.totalorder %s68, %s70
      %p74 = scmp.eq.s32.totalorder %s13, 0
      %p75 = por %p73, %p74
      %p76 = scmp.ne.s32.totalorder %s68, %s70
      %p77 = scmp.eq.s32.totalorder %s18, 1
      %p78 = por %p76, %p77
      %p79 = scmp.ne.s32.totalorder %s70, %s71
      %p80 = scmp.eq.s32.totalorder %s18, 0
      %p81 = por %p79, %p80
      %p82 = scmp.ne.s32.totalorder %s70, %s71
      %p83 = scmp.eq.s32.totalorder %s19, 1
      %p84 = por %p82, %p83
      %p86 = scmp.ne.s32.totalorder %s71, %s85
      %p87 = scmp.eq.s32.totalorder %s19, 0
      %p88 = por %p86, %p87
      %s90 = sadd.s32 %s89, 1
      %p93 = scmp.eq.s32.totalorder %s13, 1
      %p94 = scmp.ne.s32.totalorder %s89, %s91
      %p95 = scmp.eq.s32.totalorder %s13, 0
      %p96 = por %p94, %p95
      %p97 = scmp.ne.s32.totalorder %s89, %s91
      %p98 = scmp.eq.s32.totalorder %s18, 1
      %p99 = por %p97, %p98
      %p100 = scmp.ne.s32.totalorder %s91, %s92
      %p101 = scmp.eq.s32.totalorder %s18, 0
      %p102 = por %p100, %p101
      %p103 = scmp.ne.s32.totalorder %s91, %s92
      %p104 = scmp.eq.s32.totalorder %s19, 1
      %p105 = por %p103, %p104
      %p107 = scmp.ne.s32.totalorder %s92, %s106
      %p108 = scmp.eq.s32.totalorder %s19, 0
      %p109 = por %p107, %p108
      %s110 = ssub.s32 %s13, %s20
      %p111 = scmp.eq.s32.totalorder %s110, 0
      %s113 = sadd.s32 %s112, 1
      %s114 = scalar_select %p111, %s112, %s113
      %p117 = pneg %p111
      %p118 = scmp.eq.s32.totalorder %s13, 1
      %p119 = por %p117, %p118
      %p120 = scmp.ne.s32.totalorder %s112, %s115
      %p121 = scmp.eq.s32.totalorder %s13, 0
      %p122 = por %p120, %p121
      %p123 = scmp.ne.s32.totalorder %s112, %s115
      %p124 = scmp.eq.s32.totalorder %s18, 1
      %p125 = por %p123, %p124
      %p126 = scmp.ne.s32.totalorder %s115, %s116
      %p127 = scmp.eq.s32.totalorder %s18, 0
      %p128 = por %p126, %p127
      %p129 = scmp.ne.s32.totalorder %s115, %s116
      %p130 = scmp.eq.s32.totalorder %s19, 1
      %p131 = por %p129, %p130
      %p133 = scmp.ne.s32.totalorder %s116, %s132
      %p134 = scmp.eq.s32.totalorder %s19, 0
      %p135 = por %p133, %p134
      %p136 = scmp.le.s32.totalorder 1, %s13
      %p137 = scmp.lt.s32.totalorder %s13, 3
      %p138 = pnand %p136, %p137
      %p139 = pneg %p138
      // Predicated region
      $region9: #{tpu_custom_call.1} parent=5 // pred_check
        _
      $region10: #{tpu_custom_call.1} parent=5 // pred_check_branch
        %141 = sbr.rel (%p138) target = $region12
      $region11: #{tpu_custom_call.1} parent=5 // pred_region
        %s142 = ssub.s32 %s13, 1
        // Predicated region
        $region13: #{tpu_custom_call.1} parent=11 // pred_check
          %p143 = pneg %p60
        $region14: #{tpu_custom_call.1} parent=11 // pred_check_branch
          %145 = sbr.rel (%p143) target = $region16
        $region15: #{tpu_custom_call.1} parent=11 // pred_region
          _
        $region16: #{tpu_custom_call.1} parent=11 // pred_fallthru
          _
        // Predicated region
        $region17: #{tpu_custom_call.1} parent=11 // pred_check
          %p146 = pneg %p81
        $region18: #{tpu_custom_call.1} parent=11 // pred_check_branch
          %148 = sbr.rel (%p146) target = $region20
        $region19: #{tpu_custom_call.1} parent=11 // pred_region
          _
        $region20: #{tpu_custom_call.1} parent=11 // pred_fallthru
          _
        // Predicated region
        $region21: #{tpu_custom_call.1} parent=11 // pred_check
          %p149 = pneg %p102
        $region22: #{tpu_custom_call.1} parent=11 // pred_check_branch
          %151 = sbr.rel (%p149) target = $region24
        $region23: #{tpu_custom_call.1} parent=11 // pred_region
          _
        $region24: #{tpu_custom_call.1} parent=11 // pred_fallthru
          _
      $region12: #{tpu_custom_call.1} parent=5 // pred_fallthru
        _
      %p152 = scmp.lt.s32.totalorder %s13, 2
      // Predicated region
      $region25: #{tpu_custom_call.1} parent=5 // pred_check
        %p153 = pneg %p152
      $region26: #{tpu_custom_call.1} parent=5 // pred_check_branch
        %155 = sbr.rel (%p153) target = $region28
      $region27: #{tpu_custom_call.1} parent=5 // pred_region
        // Predicated region
        $region29: #{tpu_custom_call.1} parent=27 // pred_check
          %p156 = pneg %p33
        $region30: #{tpu_custom_call.1} parent=27 // pred_check_branch
          %158 = sbr.rel (%p156) target = $region32
        $region31: #{tpu_custom_call.1} parent=27 // pred_region
          %p159 = scmp.lt.s32.totalorder %s13, 1
          %s160 = scalar_select %p159, %s13, 1
          %s161 = smul.addr %s160, 2
          %s162 = smul.addr %s161, 4
          %s163 = scalar_lea.vmem %s0, %s162
        $region32: #{tpu_custom_call.1} parent=27 // pred_fallthru
          _
      $region28: #{tpu_custom_call.1} parent=5 // pred_fallthru
        _
      %p164 = scmp.le.s32.totalorder 1, %s13
      %p165 = scmp.lt.s32.totalorder %s13, 3
      %p166 = pnand %p164, %p165
      %p167 = pneg %p166
      // Predicated region
      $region33: #{tpu_custom_call.1} parent=5 // pred_check
        _
      $region34: #{tpu_custom_call.1} parent=5 // pred_check_branch
        %169 = sbr.rel (%p166) target = $region36
      $region35: #{tpu_custom_call.1} parent=5 // pred_region
        %s170 = ssub.s32 %s13, 1
        %p171 = scmp.lt.s32.totalorder %s18, 1
        %s172 = scalar_select %p171, %s18, 1
        %s173 = smul.addr %s172, 2
        %s174 = smul.addr %s173, 4
        %s175 = scalar_lea.vmem %s0, %s174
        %p176 = pneg %p39
        %p177 = pneg %p36
        %p178 = pneg %p60
        %p179 = pneg %p57
        %p180 = pneg %p81
        %p181 = pneg %p78
        %p182 = pneg %p102
        %p183 = pneg %p99
        %p184 = pneg %p128
        %p185 = pneg %p125
        %s186 = sand.u32 %s115, 1
        %s187 = scalar_lea.sflag [#allocation3], %s186
        %s188 = sand.u32 %s115, 1
        %s189 = smul.addr %s188, 16
        %s190 = scalar_lea.vmem [#allocation2], %s189
        %p191 = scmp.lt.s32.totalorder %s18, 1
        %s192 = scalar_select %p191, %s18, 1
        %s193 = smul.addr %s192, 2
        %s194 = smul.addr %s193, 4
        %s195 = scalar_lea.vmem %s0, %s194
        %v196 = vld [vmem:[%s195] sm:$0xff]
        %v198 = vcombine.high %v196, %v196
        %200 = vrot.lane.b32.xlu0 %v196, 17
        %v201 = vpop.permute.xlu0 %200
        %202 = vrot.lane.b32.xlu0 %v198, 17
        %v203 = vpop.permute.xlu0 %202
        %v204 = vlaneseq
        %v205 = vand.u32 %v204, 127
        %vm206 = vcmp.lt.s32.totalorder %v205, 17
        %v207 = vsel %vm206, %v201, %v203
        %v208 = vsel %vm206, %v203, %v201
        %v209 = vld [vmem:[%s3] sm:$0x3]
        %v211 = vlaneseq
        %v212 = vshrl.u32 %v211, 7
        %v213 = vsub.s32 0, %v212
        %v214 = vrot.slane %v209, %v213
        %v215 = vlaneseq
        %v216 = vshrl.u32 %v215, 7
        %v217 = vsub.s32 1, %v216
        %v218 = vrot.slane %v209, %v217
        %v221 = vmul.f32 %v208, %v214
        %v222 = vmul.f32 %v207, %v218
        %v223 = vld [vmem:[%s1] sm:$0xff]
        %224 = vrot.lane.b32.xlu0 %v196, 16
        %v225 = vpop.permute.xlu0 %224
        %226 = vrot.lane.b32.xlu0 %v198, 16
        %v227 = vpop.permute.xlu0 %226
        %vm228 = vcmp.lt.s32.totalorder %v205, 16
        %v229 = vsel %vm228, %v225, %v227
        %v230 = vsel %vm228, %v227, %v225
        %s231 = scalar_lea.vmem %s3, 2
        %v232 = vld [vmem:[%s231] sm:$0x3]
        %v234 = vlaneseq
        %v235 = vshrl.u32 %v234, 7
        %v236 = vsub.s32 0, %v235
        %v237 = vrot.slane %v232, %v236
        %v238 = vlaneseq
        %v239 = vshrl.u32 %v238, 7
        %v240 = vsub.s32 1, %v239
        %v241 = vrot.slane %v232, %v240
        %v244 = vmul.f32 %v230, %v237
        %v245 = vmul.f32 %v229, %v241
        %s246 = scalar_lea.vmem %s1, 8
        %v247 = vld [vmem:[%s246] sm:$0xff]
        %vm248 = vcmask 31744
        %v250 = vsel %vm248, %v247, 0
        %vm252 = vcmask 1043456
        %v254 = vsel %vm252, %v244, 0
        %v257 = vsel %vm252, %v245, 0
        %259 = vmatprep.subr.mxu0 0.0
        %260 = vmatpush1.msra.mxu0 0.0
        %261 = vmatprep.subr.mxu0 0.0
        %262 = vmatpush1.msra.mxu0 0.0
        %263 = vmatprep.subr.mxu0 0.0
        %264 = vmatpush1.msra.mxu0 0.0
        %265 = vmatprep.subr.mxu0 0.0
        %266 = vmatpush1.msra.mxu0 0.0
        %267 = vmatprep.subr.mxu0 0.0
        %268 = vmatpush1.msra.mxu0 0.0
        %269 = vmatprep.subr.mxu0 0.0
        %270 = vmatpush1.msra.mxu0 0.0
        %271 = vmatprep.subr.mxu0 0.0
        %272 = vmatpush1.msra.mxu0 0.0
        %273 = vmatprep.subr.mxu0 0.0
        %274 = vmatpush1.msra.mxu0 0.0
        %275 = vmatprep.subr.mxu0 0.0
        %276 = vmatpush1.msra.mxu0 0.0
        %277 = vmatprep.subr.mxu0 0.0
        %278 = vmatpush1.msra.mxu0 0.0
        %279 = vmatprep.subr.mxu0 0.0
        %280 = vmatpush1.msra.mxu0 0.0
        %281 = vmatprep.subr.mxu0 0.0
        %282 = vmatpush1.msra.mxu0 0.0
        %283 = vmatprep.subr.mxu0 0.0
        %284 = vmatpush1.msra.mxu0 0.0
        %285 = vmatprep.subr.mxu0 0.0
        %286 = vmatpush1.msra.mxu0 0.0
        %287 = vmatprep.subr.mxu0 0.0
        %288 = vmatpush1.msra.mxu0 0.0
        %289 = vmatprep.subr.mxu0 %v257
        %290 = vmatpush1.msra.mxu0 %v254
        %291 = vmatprep.subr.mxu0 0.0
        %292 = vmatpush2.msra.mxu0 0.0
        %293 = vmatprep.subr.mxu0 0.0
        %294 = vmatpush2.msra.mxu0 0.0
        %295 = vmatprep.subr.mxu0 0.0
        %296 = vmatpush2.msra.mxu0 0.0
        %297 = vmatprep.subr.mxu0 0.0
        %298 = vmatpush2.msra.mxu0 0.0
        %299 = vmatprep.subr.mxu0 0.0
        %300 = vmatpush2.msra.mxu0 0.0
        %301 = vmatprep.subr.mxu0 0.0
        %302 = vmatpush2.msra.mxu0 0.0
        %303 = vmatprep.subr.mxu0 0.0
        %304 = vmatpush2.msra.mxu0 0.0
        %305 = vmatprep.subr.mxu0 0.0
        %306 = vmatpush2.msra.mxu0 0.0
        %307 = vmatprep.subr.mxu0 0.0
        %308 = vmatpush2.msra.mxu0 0.0
        %309 = vmatprep.subr.mxu0 0.0
        %310 = vmatpush2.msra.mxu0 0.0
        %311 = vmatprep.subr.mxu0 0.0
        %312 = vmatpush2.msra.mxu0 0.0
        %313 = vmatprep.subr.mxu0 0.0
        %314 = vmatpush2.msra.mxu0 0.0
        %315 = vmatprep.subr.mxu0 0.0
        %316 = vmatpush2.msra.mxu0 0.0
        %317 = vmatprep.subr.mxu0 0.0
        %318 = vmatpush2.msra.mxu0 0.0
        %319 = vmatprep.subr.mxu0 0.0
        %320 = vmatpush2.msra.mxu0 0.0
        %321 = vmatprep.subr.mxu0 0.0
        %322 = vmatpush2.msra.mxu0 0.0
        %323 = vmatprep.mubr.f32.mxu0 0.0
        %324 = vmatmul.mubr.f32.gmra.mxu0 %v250
        %v325 = vpop.f32.mrf.mxu0
        %v326 = vadd.f32 0.0, %v325
        %v327 = vpop.f32.mrf.mxu0
        %v328 = vadd.f32 0.0, %v327
        %329 = vdwg.mxu0
        %v331 = vsel %vm248, %v223, 0
        %v334 = vsel %vm252, %v221, 0
        %v337 = vsel %vm252, %v222, 0
        %339 = vmatprep.subr.mxu0 0.0
        %340 = vmatpush1.msra.mxu0 0.0
        %341 = vmatprep.subr.mxu0 0.0
        %342 = vmatpush1.msra.mxu0 0.0
        %343 = vmatprep.subr.mxu0 0.0
        %344 = vmatpush1.msra.mxu0 0.0
        %345 = vmatprep.subr.mxu0 0.0
        %346 = vmatpush1.msra.mxu0 0.0
        %347 = vmatprep.subr.mxu0 0.0
        %348 = vmatpush1.msra.mxu0 0.0
        %349 = vmatprep.subr.mxu0 0.0
        %350 = vmatpush1.msra.mxu0 0.0
        %351 = vmatprep.subr.mxu0 0.0
        %352 = vmatpush1.msra.mxu0 0.0
        %353 = vmatprep.subr.mxu0 0.0
        %354 = vmatpush1.msra.mxu0 0.0
        %355 = vmatprep.subr.mxu0 0.0
        %356 = vmatpush1.msra.mxu0 0.0
        %357 = vmatprep.subr.mxu0 0.0
        %358 = vmatpush1.msra.mxu0 0.0
        %359 = vmatprep.subr.mxu0 0.0
        %360 = vmatpush1.msra.mxu0 0.0
        %361 = vmatprep.subr.mxu0 0.0
        %362 = vmatpush1.msra.mxu0 0.0
        %363 = vmatprep.subr.mxu0 0.0
        %364 = vmatpush1.msra.mxu0 0.0
        %365 = vmatprep.subr.mxu0 0.0
        %366 = vmatpush1.msra.mxu0 0.0
        %367 = vmatprep.subr.mxu0 0.0
        %368 = vmatpush1.msra.mxu0 0.0
        %369 = vmatprep.subr.mxu0 %v337
        %370 = vmatpush1.msra.mxu0 %v334
        %371 = vmatprep.subr.mxu0 0.0
        %372 = vmatpush2.msra.mxu0 0.0
        %373 = vmatprep.subr.mxu0 0.0
        %374 = vmatpush2.msra.mxu0 0.0
        %375 = vmatprep.subr.mxu0 0.0
        %376 = vmatpush2.msra.mxu0 0.0
        %377 = vmatprep.subr.mxu0 0.0
        %378 = vmatpush2.msra.mxu0 0.0
        %379 = vmatprep.subr.mxu0 0.0
        %380 = vmatpush2.msra.mxu0 0.0
        %381 = vmatprep.subr.mxu0 0.0
        %382 = vmatpush2.msra.mxu0 0.0
        %383 = vmatprep.subr.mxu0 0.0
        %384 = vmatpush2.msra.mxu0 0.0
        %385 = vmatprep.subr.mxu0 0.0
        %386 = vmatpush2.msra.mxu0 0.0
        %387 = vmatprep.subr.mxu0 0.0
        %388 = vmatpush2.msra.mxu0 0.0
        %389 = vmatprep.subr.mxu0 0.0
        %390 = vmatpush2.msra.mxu0 0.0
        %391 = vmatprep.subr.mxu0 0.0
        %392 = vmatpush2.msra.mxu0 0.0
        %393 = vmatprep.subr.mxu0 0.0
        %394 = vmatpush2.msra.mxu0 0.0
        %395 = vmatprep.subr.mxu0 0.0
        %396 = vmatpush2.msra.mxu0 0.0
        %397 = vmatprep.subr.mxu0 0.0
        %398 = vmatpush2.msra.mxu0 0.0
        %399 = vmatprep.subr.mxu0 0.0
        %400 = vmatpush2.msra.mxu0 0.0
        %401 = vmatprep.subr.mxu0 0.0
        %402 = vmatpush2.msra.mxu0 0.0
        %403 = vmatprep.mubr.f32.mxu0 0.0
        %404 = vmatmul.mubr.f32.gmra.mxu0 %v331
        %v405 = vpop.f32.mrf.mxu0
        %v406 = vadd.f32 %v326, %v405
        %v407 = vpop.f32.mrf.mxu0
        %v408 = vadd.f32 %v328, %v407
        %409 = vdwg.mxu0
        %410 = vrot.lane.b32.xlu0 %v196, 15
        %v411 = vpop.permute.xlu0 %410
        %412 = vrot.lane.b32.xlu0 %v198, 15
        %v413 = vpop.permute.xlu0 %412
        %vm414 = vcmp.lt.s32.totalorder %v205, 15
        %v415 = vsel %vm414, %v411, %v413
        %v416 = vsel %vm414, %v413, %v411
        %s417 = scalar_lea.vmem %s3, 4
        %v418 = vld [vmem:[%s417] sm:$0x3]
        %v420 = vlaneseq
        %v421 = vshrl.u32 %v420, 7
        %v422 = vsub.s32 0, %v421
        %v423 = vrot.slane %v418, %v422
        %v424 = vlaneseq
        %v425 = vshrl.u32 %v424, 7
        %v426 = vsub.s32 1, %v425
        %v427 = vrot.slane %v418, %v426
        %v430 = vmul.f32 %v416, %v423
        %v431 = vmul.f32 %v415, %v427
        %s432 = scalar_lea.vmem %s1, 16
        %v433 = vld [vmem:[%s432] sm:$0xff]
        %v435 = vsel %vm248, %v433, 0
        %v438 = vsel %vm252, %v430, 0
        %v441 = vsel %vm252, %v431, 0
        %443 = vmatprep.subr.mxu0 0.0
        %444 = vmatpush1.msra.mxu0 0.0
        %445 = vmatprep.subr.mxu0 0.0
        %446 = vmatpush1.msra.mxu0 0.0
        %447 = vmatprep.subr.mxu0 0.0
        %448 = vmatpush1.msra.mxu0 0.0
        %449 = vmatprep.subr.mxu0 0.0
        %450 = vmatpush1.msra.mxu0 0.0
        %451 = vmatprep.subr.mxu0 0.0
        %452 = vmatpush1.msra.mxu0 0.0
        %453 = vmatprep.subr.mxu0 0.0
        %454 = vmatpush1.msra.mxu0 0.0
        %455 = vmatprep.subr.mxu0 0.0
        %456 = vmatpush1.msra.mxu0 0.0
        %457 = vmatprep.subr.mxu0 0.0
        %458 = vmatpush1.msra.mxu0 0.0
        %459 = vmatprep.subr.mxu0 0.0
        %460 = vmatpush1.msra.mxu0 0.0
        %461 = vmatprep.subr.mxu0 0.0
        %462 = vmatpush1.msra.mxu0 0.0
        %463 = vmatprep.subr.mxu0 0.0
        %464 = vmatpush1.msra.mxu0 0.0
        %465 = vmatprep.subr.mxu0 0.0
        %466 = vmatpush1.msra.mxu0 0.0
        %467 = vmatprep.subr.mxu0 0.0
        %468 = vmatpush1.msra.mxu0 0.0
        %469 = vmatprep.subr.mxu0 0.0
        %470 = vmatpush1.msra.mxu0 0.0
        %471 = vmatprep.subr.mxu0 0.0
        %472 = vmatpush1.msra.mxu0 0.0
        %473 = vmatprep.subr.mxu0 %v441
        %474 = vmatpush1.msra.mxu0 %v438
        %475 = vmatprep.subr.mxu0 0.0
        %476 = vmatpush2.msra.mxu0 0.0
        %477 = vmatprep.subr.mxu0 0.0
        %478 = vmatpush2.msra.mxu0 0.0
        %479 = vmatprep.subr.mxu0 0.0
        %480 = vmatpush2.msra.mxu0 0.0
        %481 = vmatprep.subr.mxu0 0.0
        %482 = vmatpush2.msra.mxu0 0.0
        %483 = vmatprep.subr.mxu0 0.0
        %484 = vmatpush2.msra.mxu0 0.0
        %485 = vmatprep.subr.mxu0 0.0
        %486 = vmatpush2.msra.mxu0 0.0
        %487 = vmatprep.subr.mxu0 0.0
        %488 = vmatpush2.msra.mxu0 0.0
        %489 = vmatprep.subr.mxu0 0.0
        %490 = vmatpush2.msra.mxu0 0.0
        %491 = vmatprep.subr.mxu0 0.0
        %492 = vmatpush2.msra.mxu0 0.0
        %493 = vmatprep.subr.mxu0 0.0
        %494 = vmatpush2.msra.mxu0 0.0
        %495 = vmatprep.subr.mxu0 0.0
        %496 = vmatpush2.msra.mxu0 0.0
        %497 = vmatprep.subr.mxu0 0.0
        %498 = vmatpush2.msra.mxu0 0.0
        %499 = vmatprep.subr.mxu0 0.0
        %500 = vmatpush2.msra.mxu0 0.0
        %501 = vmatprep.subr.mxu0 0.0
        %502 = vmatpush2.msra.mxu0 0.0
        %503 = vmatprep.subr.mxu0 0.0
        %504 = vmatpush2.msra.mxu0 0.0
        %505 = vmatprep.subr.mxu0 0.0
        %506 = vmatpush2.msra.mxu0 0.0
        %507 = vmatprep.mubr.f32.mxu0 0.0
        %508 = vmatmul.mubr.f32.gmra.mxu0 %v435
        %v509 = vpop.f32.mrf.mxu0
        %v510 = vadd.f32 0.0, %v509
        %v511 = vpop.f32.mrf.mxu0
        %v512 = vadd.f32 0.0, %v511
        %513 = vdwg.mxu0
        %v514 = vadd.f32 %v406, %v510
        %v515 = vadd.f32 %v408, %v512
        %516 = vrot.lane.b32.xlu0 %v196, 1
        %v517 = vpop.permute.xlu0 %516
        %518 = vrot.lane.b32.xlu0 %v198, 1
        %v519 = vpop.permute.xlu0 %518
        %vm520 = vcmp.lt.s32.totalorder %v205, 1
        %v521 = vsel %vm520, %v517, %v519
        %v522 = vsel %vm520, %v519, %v517
        %s523 = scalar_lea.vmem %s3, 6
        %v524 = vld [vmem:[%s523] sm:$0x3]
        %v526 = vlaneseq
        %v527 = vshrl.u32 %v526, 7
        %v528 = vsub.s32 0, %v527
        %v529 = vrot.slane %v524, %v528
        %v530 = vlaneseq
        %v531 = vshrl.u32 %v530, 7
        %v532 = vsub.s32 1, %v531
        %v533 = vrot.slane %v524, %v532
        %v536 = vmul.f32 %v522, %v529
        %v537 = vmul.f32 %v521, %v533
        %s538 = scalar_lea.vmem %s1, 24
        %v539 = vld [vmem:[%s538] sm:$0xff]
        %v541 = vsel %vm248, %v539, 0
        %v544 = vsel %vm252, %v536, 0
        %v547 = vsel %vm252, %v537, 0
        %549 = vmatprep.subr.mxu0 0.0
        %550 = vmatpush1.msra.mxu0 0.0
        %551 = vmatprep.subr.mxu0 0.0
        %552 = vmatpush1.msra.mxu0 0.0
        %553 = vmatprep.subr.mxu0 0.0
        %554 = vmatpush1.msra.mxu0 0.0
        %555 = vmatprep.subr.mxu0 0.0
        %556 = vmatpush1.msra.mxu0 0.0
        %557 = vmatprep.subr.mxu0 0.0
        %558 = vmatpush1.msra.mxu0 0.0
        %559 = vmatprep.subr.mxu0 0.0
        %560 = vmatpush1.msra.mxu0 0.0
        %561 = vmatprep.subr.mxu0 0.0
        %562 = vmatpush1.msra.mxu0 0.0
        %563 = vmatprep.subr.mxu0 0.0
        %564 = vmatpush1.msra.mxu0 0.0
        %565 = vmatprep.subr.mxu0 0.0
        %566 = vmatpush1.msra.mxu0 0.0
        %567 = vmatprep.subr.mxu0 0.0
        %568 = vmatpush1.msra.mxu0 0.0
        %569 = vmatprep.subr.mxu0 0.0
        %570 = vmatpush1.msra.mxu0 0.0
        %571 = vmatprep.subr.mxu0 0.0
        %572 = vmatpush1.msra.mxu0 0.0
        %573 = vmatprep.subr.mxu0 0.0
        %574 = vmatpush1.msra.mxu0 0.0
        %575 = vmatprep.subr.mxu0 0.0
        %576 = vmatpush1.msra.mxu0 0.0
        %577 = vmatprep.subr.mxu0 0.0
        %578 = vmatpush1.msra.mxu0 0.0
        %579 = vmatprep.subr.mxu0 %v547
        %580 = vmatpush1.msra.mxu0 %v544
        %581 = vmatprep.subr.mxu0 0.0
        %582 = vmatpush2.msra.mxu0 0.0
        %583 = vmatprep.subr.mxu0 0.0
        %584 = vmatpush2.msra.mxu0 0.0
        %585 = vmatprep.subr.mxu0 0.0
        %586 = vmatpush2.msra.mxu0 0.0
        %587 = vmatprep.subr.mxu0 0.0
        %588 = vmatpush2.msra.mxu0 0.0
        %589 = vmatprep.subr.mxu0 0.0
        %590 = vmatpush2.msra.mxu0 0.0
        %591 = vmatprep.subr.mxu0 0.0
        %592 = vmatpush2.msra.mxu0 0.0
        %593 = vmatprep.subr.mxu0 0.0
        %594 = vmatpush2.msra.mxu0 0.0
        %595 = vmatprep.subr.mxu0 0.0
        %596 = vmatpush2.msra.mxu0 0.0
        %597 = vmatprep.subr.mxu0 0.0
        %598 = vmatpush2.msra.mxu0 0.0
        %599 = vmatprep.subr.mxu0 0.0
        %600 = vmatpush2.msra.mxu0 0.0
        %601 = vmatprep.subr.mxu0 0.0
        %602 = vmatpush2.msra.mxu0 0.0
        %603 = vmatprep.subr.mxu0 0.0
        %604 = vmatpush2.msra.mxu0 0.0
        %605 = vmatprep.subr.mxu0 0.0
        %606 = vmatpush2.msra.mxu0 0.0
        %607 = vmatprep.subr.mxu0 0.0
        %608 = vmatpush2.msra.mxu0 0.0
        %609 = vmatprep.subr.mxu0 0.0
        %610 = vmatpush2.msra.mxu0 0.0
        %611 = vmatprep.subr.mxu0 0.0
        %612 = vmatpush2.msra.mxu0 0.0
        %613 = vmatprep.mubr.f32.mxu0 0.0
        %614 = vmatmul.mubr.f32.gmra.mxu0 %v541
        %v615 = vpop.f32.mrf.mxu0
        %v616 = vadd.f32 0.0, %v615
        %v617 = vpop.f32.mrf.mxu0
        %v618 = vadd.f32 0.0, %v617
        %619 = vdwg.mxu0
        %v620 = vadd.f32 %v514, %v616
        %v621 = vadd.f32 %v515, %v618
        %s622 = scalar_lea.vmem %s1, 32
        %v623 = vld [vmem:[%s622] sm:$0xff]
        %v625 = vsel %vm248, %v623, 0
        %v627 = vsel %vm252, %v196, 0
        %v629 = vsel %vm252, %v198, 0
        %631 = vmatprep.subr.mxu0 0.0
        %632 = vmatpush1.msra.mxu0 0.0
        %633 = vmatprep.subr.mxu0 0.0
        %634 = vmatpush1.msra.mxu0 0.0
        %635 = vmatprep.subr.mxu0 0.0
        %636 = vmatpush1.msra.mxu0 0.0
        %637 = vmatprep.subr.mxu0 0.0
        %638 = vmatpush1.msra.mxu0 0.0
        %639 = vmatprep.subr.mxu0 0.0
        %640 = vmatpush1.msra.mxu0 0.0
        %641 = vmatprep.subr.mxu0 0.0
        %642 = vmatpush1.msra.mxu0 0.0
        %643 = vmatprep.subr.mxu0 0.0
        %644 = vmatpush1.msra.mxu0 0.0
        %645 = vmatprep.subr.mxu0 0.0
        %646 = vmatpush1.msra.mxu0 0.0
        %647 = vmatprep.subr.mxu0 0.0
        %648 = vmatpush1.msra.mxu0 0.0
        %649 = vmatprep.subr.mxu0 0.0
        %650 = vmatpush1.msra.mxu0 0.0
        %651 = vmatprep.subr.mxu0 0.0
        %652 = vmatpush1.msra.mxu0 0.0
        %653 = vmatprep.subr.mxu0 0.0
        %654 = vmatpush1.msra.mxu0 0.0
        %655 = vmatprep.subr.mxu0 0.0
        %656 = vmatpush1.msra.mxu0 0.0
        %657 = vmatprep.subr.mxu0 0.0
        %658 = vmatpush1.msra.mxu0 0.0
        %659 = vmatprep.subr.mxu0 0.0
        %660 = vmatpush1.msra.mxu0 0.0
        %661 = vmatprep.subr.mxu0 %v629
        %662 = vmatpush1.msra.mxu0 %v627
        %663 = vmatprep.subr.mxu0 0.0
        %664 = vmatpush2.msra.mxu0 0.0
        %665 = vmatprep.subr.mxu0 0.0
        %666 = vmatpush2.msra.mxu0 0.0
        %667 = vmatprep.subr.mxu0 0.0
        %668 = vmatpush2.msra.mxu0 0.0
        %669 = vmatprep.subr.mxu0 0.0
        %670 = vmatpush2.msra.mxu0 0.0
        %671 = vmatprep.subr.mxu0 0.0
        %672 = vmatpush2.msra.mxu0 0.0
        %673 = vmatprep.subr.mxu0 0.0
        %674 = vmatpush2.msra.mxu0 0.0
        %675 = vmatprep.subr.mxu0 0.0
        %676 = vmatpush2.msra.mxu0 0.0
        %677 = vmatprep.subr.mxu0 0.0
        %678 = vmatpush2.msra.mxu0 0.0
        %679 = vmatprep.subr.mxu0 0.0
        %680 = vmatpush2.msra.mxu0 0.0
        %681 = vmatprep.subr.mxu0 0.0
        %682 = vmatpush2.msra.mxu0 0.0
        %683 = vmatprep.subr.mxu0 0.0
        %684 = vmatpush2.msra.mxu0 0.0
        %685 = vmatprep.subr.mxu0 0.0
        %686 = vmatpush2.msra.mxu0 0.0
        %687 = vmatprep.subr.mxu0 0.0
        %688 = vmatpush2.msra.mxu0 0.0
        %689 = vmatprep.subr.mxu0 0.0
        %690 = vmatpush2.msra.mxu0 0.0
        %691 = vmatprep.subr.mxu0 0.0
        %692 = vmatpush2.msra.mxu0 0.0
        %693 = vmatprep.subr.mxu0 0.0
        %694 = vmatpush2.msra.mxu0 0.0
        %695 = vmatprep.mubr.f32.mxu0 0.0
        %696 = vmatmul.mubr.f32.gmra.mxu0 %v625
        %v697 = vpop.f32.mrf.mxu0
        %v698 = vadd.f32 0.0, %v697
        %v699 = vpop.f32.mrf.mxu0
        %v700 = vadd.f32 0.0, %v699
        %701 = vdwg.mxu0
        %v702 = vadd.f32 %v620, %v698
        %v703 = vadd.f32 %v621, %v700
        %704 = vrot.lane.b32.xlu0 %v196, 127
        %v705 = vpop.permute.xlu0 %704
        %706 = vrot.lane.b32.xlu0 %v198, 127
        %v707 = vpop.permute.xlu0 %706
        %vm708 = vcmp.lt.s32.totalorder %v205, 127
        %v709 = vsel %vm708, %v705, %v707
        %v710 = vsel %vm708, %v707, %v705
        %s711 = scalar_lea.vmem %s3, 10
        %v712 = vld [vmem:[%s711] sm:$0x3]
        %v714 = vlaneseq
        %v715 = vshrl.u32 %v714, 7
        %v716 = vsub.s32 0, %v715
        %v717 = vrot.slane %v712, %v716
        %v718 = vlaneseq
        %v719 = vshrl.u32 %v718, 7
        %v720 = vsub.s32 1, %v719
        %v721 = vrot.slane %v712, %v720
        %v724 = vmul.f32 %v709, %v717
        %v725 = vmul.f32 %v710, %v721
        %s726 = scalar_lea.vmem %s1, 40
        %v727 = vld [vmem:[%s726] sm:$0xff]
        %v729 = vsel %vm248, %v727, 0
        %v732 = vsel %vm252, %v724, 0
        %v735 = vsel %vm252, %v725, 0
        %737 = vmatprep.subr.mxu0 0.0
        %738 = vmatpush1.msra.mxu0 0.0
        %739 = vmatprep.subr.mxu0 0.0
        %740 = vmatpush1.msra.mxu0 0.0
        %741 = vmatprep.subr.mxu0 0.0
        %742 = vmatpush1.msra.mxu0 0.0
        %743 = vmatprep.subr.mxu0 0.0
        %744 = vmatpush1.msra.mxu0 0.0
        %745 = vmatprep.subr.mxu0 0.0
        %746 = vmatpush1.msra.mxu0 0.0
        %747 = vmatprep.subr.mxu0 0.0
        %748 = vmatpush1.msra.mxu0 0.0
        %749 = vmatprep.subr.mxu0 0.0
        %750 = vmatpush1.msra.mxu0 0.0
        %751 = vmatprep.subr.mxu0 0.0
        %752 = vmatpush1.msra.mxu0 0.0
        %753 = vmatprep.subr.mxu0 0.0
        %754 = vmatpush1.msra.mxu0 0.0
        %755 = vmatprep.subr.mxu0 0.0
        %756 = vmatpush1.msra.mxu0 0.0
        %757 = vmatprep.subr.mxu0 0.0
        %758 = vmatpush1.msra.mxu0 0.0
        %759 = vmatprep.subr.mxu0 0.0
        %760 = vmatpush1.msra.mxu0 0.0
        %761 = vmatprep.subr.mxu0 0.0
        %762 = vmatpush1.msra.mxu0 0.0
        %763 = vmatprep.subr.mxu0 0.0
        %764 = vmatpush1.msra.mxu0 0.0
        %765 = vmatprep.subr.mxu0 0.0
        %766 = vmatpush1.msra.mxu0 0.0
        %767 = vmatprep.subr.mxu0 %v735
        %768 = vmatpush1.msra.mxu0 %v732
        %769 = vmatprep.subr.mxu0 0.0
        %770 = vmatpush2.msra.mxu0 0.0
        %771 = vmatprep.subr.mxu0 0.0
        %772 = vmatpush2.msra.mxu0 0.0
        %773 = vmatprep.subr.mxu0 0.0
        %774 = vmatpush2.msra.mxu0 0.0
        %775 = vmatprep.subr.mxu0 0.0
        %776 = vmatpush2.msra.mxu0 0.0
        %777 = vmatprep.subr.mxu0 0.0
        %778 = vmatpush2.msra.mxu0 0.0
        %779 = vmatprep.subr.mxu0 0.0
        %780 = vmatpush2.msra.mxu0 0.0
        %781 = vmatprep.subr.mxu0 0.0
        %782 = vmatpush2.msra.mxu0 0.0
        %783 = vmatprep.subr.mxu0 0.0
        %784 = vmatpush2.msra.mxu0 0.0
        %785 = vmatprep.subr.mxu0 0.0
        %786 = vmatpush2.msra.mxu0 0.0
        %787 = vmatprep.subr.mxu0 0.0
        %788 = vmatpush2.msra.mxu0 0.0
        %789 = vmatprep.subr.mxu0 0.0
        %790 = vmatpush2.msra.mxu0 0.0
        %791 = vmatprep.subr.mxu0 0.0
        %792 = vmatpush2.msra.mxu0 0.0
        %793 = vmatprep.subr.mxu0 0.0
        %794 = vmatpush2.msra.mxu0 0.0
        %795 = vmatprep.subr.mxu0 0.0
        %796 = vmatpush2.msra.mxu0 0.0
        %797 = vmatprep.subr.mxu0 0.0
        %798 = vmatpush2.msra.mxu0 0.0
        %799 = vmatprep.subr.mxu0 0.0
        %800 = vmatpush2.msra.mxu0 0.0
        %801 = vmatprep.mubr.f32.mxu0 0.0
        %802 = vmatmul.mubr.f32.gmra.mxu0 %v729
        %v803 = vpop.f32.mrf.mxu0
        %v804 = vadd.f32 0.0, %v803
        %v805 = vpop.f32.mrf.mxu0
        %v806 = vadd.f32 0.0, %v805
        %807 = vdwg.mxu0
        %v808 = vadd.f32 %v702, %v804
        %v809 = vadd.f32 %v703, %v806
        %810 = vrot.lane.b32.xlu0 %v196, 113
        %v811 = vpop.permute.xlu0 %810
        %812 = vrot.lane.b32.xlu0 %v198, 113
        %v813 = vpop.permute.xlu0 %812
        %vm814 = vcmp.lt.s32.totalorder %v205, 113
        %v815 = vsel %vm814, %v811, %v813
        %v816 = vsel %vm814, %v813, %v811
        %s817 = scalar_lea.vmem %s3, 12
        %v818 = vld [vmem:[%s817] sm:$0x3]
        %v820 = vlaneseq
        %v821 = vshrl.u32 %v820, 7
        %v822 = vsub.s32 0, %v821
        %v823 = vrot.slane %v818, %v822
        %v824 = vlaneseq
        %v825 = vshrl.u32 %v824, 7
        %v826 = vsub.s32 1, %v825
        %v827 = vrot.slane %v818, %v826
        %v830 = vmul.f32 %v815, %v823
        %v831 = vmul.f32 %v816, %v827
        %s832 = scalar_lea.vmem %s1, 48
        %v833 = vld [vmem:[%s832] sm:$0xff]
        %v835 = vsel %vm248, %v833, 0
        %v838 = vsel %vm252, %v830, 0
        %v841 = vsel %vm252, %v831, 0
        %843 = vmatprep.subr.mxu0 0.0
        %844 = vmatpush1.msra.mxu0 0.0
        %845 = vmatprep.subr.mxu0 0.0
        %846 = vmatpush1.msra.mxu0 0.0
        %847 = vmatprep.subr.mxu0 0.0
        %848 = vmatpush1.msra.mxu0 0.0
        %849 = vmatprep.subr.mxu0 0.0
        %850 = vmatpush1.msra.mxu0 0.0
        %851 = vmatprep.subr.mxu0 0.0
        %852 = vmatpush1.msra.mxu0 0.0
        %853 = vmatprep.subr.mxu0 0.0
        %854 = vmatpush1.msra.mxu0 0.0
        %855 = vmatprep.subr.mxu0 0.0
        %856 = vmatpush1.msra.mxu0 0.0
        %857 = vmatprep.subr.mxu0 0.0
        %858 = vmatpush1.msra.mxu0 0.0
        %859 = vmatprep.subr.mxu0 0.0
        %860 = vmatpush1.msra.mxu0 0.0
        %861 = vmatprep.subr.mxu0 0.0
        %862 = vmatpush1.msra.mxu0 0.0
        %863 = vmatprep.subr.mxu0 0.0
        %864 = vmatpush1.msra.mxu0 0.0
        %865 = vmatprep.subr.mxu0 0.0
        %866 = vmatpush1.msra.mxu0 0.0
        %867 = vmatprep.subr.mxu0 0.0
        %868 = vmatpush1.msra.mxu0 0.0
        %869 = vmatprep.subr.mxu0 0.0
        %870 = vmatpush1.msra.mxu0 0.0
        %871 = vmatprep.subr.mxu0 0.0
        %872 = vmatpush1.msra.mxu0 0.0
        %873 = vmatprep.subr.mxu0 %v841
        %874 = vmatpush1.msra.mxu0 %v838
        %875 = vmatprep.subr.mxu0 0.0
        %876 = vmatpush2.msra.mxu0 0.0
        %877 = vmatprep.subr.mxu0 0.0
        %878 = vmatpush2.msra.mxu0 0.0
        %879 = vmatprep.subr.mxu0 0.0
        %880 = vmatpush2.msra.mxu0 0.0
        %881 = vmatprep.subr.mxu0 0.0
        %882 = vmatpush2.msra.mxu0 0.0
        %883 = vmatprep.subr.mxu0 0.0
        %884 = vmatpush2.msra.mxu0 0.0
        %885 = vmatprep.subr.mxu0 0.0
        %886 = vmatpush2.msra.mxu0 0.0
        %887 = vmatprep.subr.mxu0 0.0
        %888 = vmatpush2.msra.mxu0 0.0
        %889 = vmatprep.subr.mxu0 0.0
        %890 = vmatpush2.msra.mxu0 0.0
        %891 = vmatprep.subr.mxu0 0.0
        %892 = vmatpush2.msra.mxu0 0.0
        %893 = vmatprep.subr.mxu0 0.0
        %894 = vmatpush2.msra.mxu0 0.0
        %895 = vmatprep.subr.mxu0 0.0
        %896 = vmatpush2.msra.mxu0 0.0
        %897 = vmatprep.subr.mxu0 0.0
        %898 = vmatpush2.msra.mxu0 0.0
        %899 = vmatprep.subr.mxu0 0.0
        %900 = vmatpush2.msra.mxu0 0.0
        %901 = vmatprep.subr.mxu0 0.0
        %902 = vmatpush2.msra.mxu0 0.0
        %903 = vmatprep.subr.mxu0 0.0
        %904 = vmatpush2.msra.mxu0 0.0
        %905 = vmatprep.subr.mxu0 0.0
        %906 = vmatpush2.msra.mxu0 0.0
        %907 = vmatprep.mubr.f32.mxu0 0.0
        %908 = vmatmul.mubr.f32.gmra.mxu0 %v835
        %v909 = vpop.f32.mrf.mxu0
        %v910 = vadd.f32 0.0, %v909
        %v911 = vpop.f32.mrf.mxu0
        %v912 = vadd.f32 0.0, %v911
        %913 = vdwg.mxu0
        %v914 = vadd.f32 %v808, %v910
        %v915 = vadd.f32 %v809, %v912
        %916 = vrot.lane.b32.xlu0 %v196, 112
        %v917 = vpop.permute.xlu0 %916
        %918 = vrot.lane.b32.xlu0 %v198, 112
        %v919 = vpop.permute.xlu0 %918
        %vm920 = vcmp.lt.s32.totalorder %v205, 112
        %v921 = vsel %vm920, %v917, %v919
        %v922 = vsel %vm920, %v919, %v917
        %s923 = scalar_lea.vmem %s3, 14
        %v924 = vld [vmem:[%s923] sm:$0x3]
        %v926 = vlaneseq
        %v927 = vshrl.u32 %v926, 7
        %v928 = vsub.s32 0, %v927
        %v929 = vrot.slane %v924, %v928
        %v930 = vlaneseq
        %v931 = vshrl.u32 %v930, 7
        %v932 = vsub.s32 1, %v931
        %v933 = vrot.slane %v924, %v932
        %v936 = vmul.f32 %v921, %v929
        %v937 = vmul.f32 %v922, %v933
        %s938 = scalar_lea.vmem %s1, 56
        %v939 = vld [vmem:[%s938] sm:$0xff]
        %v941 = vsel %vm248, %v939, 0
        %v944 = vsel %vm252, %v936, 0
        %v947 = vsel %vm252, %v937, 0
        %949 = vmatprep.subr.mxu0 0.0
        %950 = vmatpush1.msra.mxu0 0.0
        %951 = vmatprep.subr.mxu0 0.0
        %952 = vmatpush1.msra.mxu0 0.0
        %953 = vmatprep.subr.mxu0 0.0
        %954 = vmatpush1.msra.mxu0 0.0
        %955 = vmatprep.subr.mxu0 0.0
        %956 = vmatpush1.msra.mxu0 0.0
        %957 = vmatprep.subr.mxu0 0.0
        %958 = vmatpush1.msra.mxu0 0.0
        %959 = vmatprep.subr.mxu0 0.0
        %960 = vmatpush1.msra.mxu0 0.0
        %961 = vmatprep.subr.mxu0 0.0
        %962 = vmatpush1.msra.mxu0 0.0
        %963 = vmatprep.subr.mxu0 0.0
        %964 = vmatpush1.msra.mxu0 0.0
        %965 = vmatprep.subr.mxu0 0.0
        %966 = vmatpush1.msra.mxu0 0.0
        %967 = vmatprep.subr.mxu0 0.0
        %968 = vmatpush1.msra.mxu0 0.0
        %969 = vmatprep.subr.mxu0 0.0
        %970 = vmatpush1.msra.mxu0 0.0
        %971 = vmatprep.subr.mxu0 0.0
        %972 = vmatpush1.msra.mxu0 0.0
        %973 = vmatprep.subr.mxu0 0.0
        %974 = vmatpush1.msra.mxu0 0.0
        %975 = vmatprep.subr.mxu0 0.0
        %976 = vmatpush1.msra.mxu0 0.0
        %977 = vmatprep.subr.mxu0 0.0
        %978 = vmatpush1.msra.mxu0 0.0
        %979 = vmatprep.subr.mxu0 %v947
        %980 = vmatpush1.msra.mxu0 %v944
        %981 = vmatprep.subr.mxu0 0.0
        %982 = vmatpush2.msra.mxu0 0.0
        %983 = vmatprep.subr.mxu0 0.0
        %984 = vmatpush2.msra.mxu0 0.0
        %985 = vmatprep.subr.mxu0 0.0
        %986 = vmatpush2.msra.mxu0 0.0
        %987 = vmatprep.subr.mxu0 0.0
        %988 = vmatpush2.msra.mxu0 0.0
        %989 = vmatprep.subr.mxu0 0.0
        %990 = vmatpush2.msra.mxu0 0.0
        %991 = vmatprep.subr.mxu0 0.0
        %992 = vmatpush2.msra.mxu0 0.0
        %993 = vmatprep.subr.mxu0 0.0
        %994 = vmatpush2.msra.mxu0 0.0
        %995 = vmatprep.subr.mxu0 0.0
        %996 = vmatpush2.msra.mxu0 0.0
        %997 = vmatprep.subr.mxu0 0.0
        %998 = vmatpush2.msra.mxu0 0.0
        %999 = vmatprep.subr.mxu0 0.0
        %1000 = vmatpush2.msra.mxu0 0.0
        %1001 = vmatprep.subr.mxu0 0.0
        %1002 = vmatpush2.msra.mxu0 0.0
        %1003 = vmatprep.subr.mxu0 0.0
        %1004 = vmatpush2.msra.mxu0 0.0
        %1005 = vmatprep.subr.mxu0 0.0
        %1006 = vmatpush2.msra.mxu0 0.0
        %1007 = vmatprep.subr.mxu0 0.0
        %1008 = vmatpush2.msra.mxu0 0.0
        %1009 = vmatprep.subr.mxu0 0.0
        %1010 = vmatpush2.msra.mxu0 0.0
        %1011 = vmatprep.subr.mxu0 0.0
        %1012 = vmatpush2.msra.mxu0 0.0
        %1013 = vmatprep.mubr.f32.mxu0 0.0
        %1014 = vmatmul.mubr.f32.gmra.mxu0 %v941
        %v1015 = vpop.f32.mrf.mxu0
        %v1016 = vadd.f32 0.0, %v1015
        %v1017 = vpop.f32.mrf.mxu0
        %v1018 = vadd.f32 0.0, %v1017
        %1019 = vdwg.mxu0
        %v1020 = vadd.f32 %v914, %v1016
        %v1021 = vadd.f32 %v915, %v1018
        %1022 = vrot.lane.b32.xlu0 %v196, 111
        %v1023 = vpop.permute.xlu0 %1022
        %1024 = vrot.lane.b32.xlu0 %v198, 111
        %v1025 = vpop.permute.xlu0 %1024
        %vm1026 = vcmp.lt.s32.totalorder %v205, 111
        %v1027 = vsel %vm1026, %v1023, %v1025
        %v1028 = vsel %vm1026, %v1025, %v1023
        %s1029 = scalar_lea.vmem %s3, 16
        %v1030 = vld [vmem:[%s1029] sm:$0x3]
        %v1032 = vlaneseq
        %v1033 = vshrl.u32 %v1032, 7
        %v1034 = vsub.s32 0, %v1033
        %v1035 = vrot.slane %v1030, %v1034
        %v1036 = vlaneseq
        %v1037 = vshrl.u32 %v1036, 7
        %v1038 = vsub.s32 1, %v1037
        %v1039 = vrot.slane %v1030, %v1038
        %v1042 = vmul.f32 %v1027, %v1035
        %v1043 = vmul.f32 %v1028, %v1039
        %s1044 = scalar_lea.vmem %s1, 64
        %v1045 = vld [vmem:[%s1044] sm:$0xff]
        %v1047 = vsel %vm248, %v1045, 0
        %v1050 = vsel %vm252, %v1042, 0
        %v1053 = vsel %vm252, %v1043, 0
        %1055 = vmatprep.subr.mxu0 0.0
        %1056 = vmatpush1.msra.mxu0 0.0
        %1057 = vmatprep.subr.mxu0 0.0
        %1058 = vmatpush1.msra.mxu0 0.0
        %1059 = vmatprep.subr.mxu0 0.0
        %1060 = vmatpush1.msra.mxu0 0.0
        %1061 = vmatprep.subr.mxu0 0.0
        %1062 = vmatpush1.msra.mxu0 0.0
        %1063 = vmatprep.subr.mxu0 0.0
        %1064 = vmatpush1.msra.mxu0 0.0
        %1065 = vmatprep.subr.mxu0 0.0
        %1066 = vmatpush1.msra.mxu0 0.0
        %1067 = vmatprep.subr.mxu0 0.0
        %1068 = vmatpush1.msra.mxu0 0.0
        %1069 = vmatprep.subr.mxu0 0.0
        %1070 = vmatpush1.msra.mxu0 0.0
        %1071 = vmatprep.subr.mxu0 0.0
        %1072 = vmatpush1.msra.mxu0 0.0
        %1073 = vmatprep.subr.mxu0 0.0
        %1074 = vmatpush1.msra.mxu0 0.0
        %1075 = vmatprep.subr.mxu0 0.0
        %1076 = vmatpush1.msra.mxu0 0.0
        %1077 = vmatprep.subr.mxu0 0.0
        %1078 = vmatpush1.msra.mxu0 0.0
        %1079 = vmatprep.subr.mxu0 0.0
        %1080 = vmatpush1.msra.mxu0 0.0
        %1081 = vmatprep.subr.mxu0 0.0
        %1082 = vmatpush1.msra.mxu0 0.0
        %1083 = vmatprep.subr.mxu0 0.0
        %1084 = vmatpush1.msra.mxu0 0.0
        %1085 = vmatprep.subr.mxu0 %v1053
        %1086 = vmatpush1.msra.mxu0 %v1050
        %1087 = vmatprep.subr.mxu0 0.0
        %1088 = vmatpush2.msra.mxu0 0.0
        %1089 = vmatprep.subr.mxu0 0.0
        %1090 = vmatpush2.msra.mxu0 0.0
        %1091 = vmatprep.subr.mxu0 0.0
        %1092 = vmatpush2.msra.mxu0 0.0
        %1093 = vmatprep.subr.mxu0 0.0
        %1094 = vmatpush2.msra.mxu0 0.0
        %1095 = vmatprep.subr.mxu0 0.0
        %1096 = vmatpush2.msra.mxu0 0.0
        %1097 = vmatprep.subr.mxu0 0.0
        %1098 = vmatpush2.msra.mxu0 0.0
        %1099 = vmatprep.subr.mxu0 0.0
        %1100 = vmatpush2.msra.mxu0 0.0
        %1101 = vmatprep.subr.mxu0 0.0
        %1102 = vmatpush2.msra.mxu0 0.0
        %1103 = vmatprep.subr.mxu0 0.0
        %1104 = vmatpush2.msra.mxu0 0.0
        %1105 = vmatprep.subr.mxu0 0.0
        %1106 = vmatpush2.msra.mxu0 0.0
        %1107 = vmatprep.subr.mxu0 0.0
        %1108 = vmatpush2.msra.mxu0 0.0
        %1109 = vmatprep.subr.mxu0 0.0
        %1110 = vmatpush2.msra.mxu0 0.0
        %1111 = vmatprep.subr.mxu0 0.0
        %1112 = vmatpush2.msra.mxu0 0.0
        %1113 = vmatprep.subr.mxu0 0.0
        %1114 = vmatpush2.msra.mxu0 0.0
        %1115 = vmatprep.subr.mxu0 0.0
        %1116 = vmatpush2.msra.mxu0 0.0
        %1117 = vmatprep.subr.mxu0 0.0
        %1118 = vmatpush2.msra.mxu0 0.0
        %1119 = vmatprep.mubr.f32.mxu0 0.0
        %1120 = vmatmul.mubr.f32.gmra.mxu0 %v1047
        %v1121 = vpop.f32.mrf.mxu0
        %v1122 = vadd.f32 0.0, %v1121
        %v1123 = vpop.f32.mrf.mxu0
        %v1124 = vadd.f32 0.0, %v1123
        %1125 = vdwg.mxu0
        %v1126 = vadd.f32 %v1020, %v1122
        %v1127 = vadd.f32 %v1021, %v1124
        %v1128 = vld [vmem:[%s2] sm:$0xff]
        %1130 = vset.pattern.permute.xlu0 0
        %1131 = vperm.xlu0 %1130, %v1128
        %v1132 = vpop.permute.xlu0 %1131
        %v1134 = vadd.f32 %v1126, %v1132
        %v1135 = vadd.f32 %v1127, %v1132
        %1136 = vst [vmem:[%s190] sm:$0xff] %v1134
        %1137 = vst [vmem:[%s190 + $0x8] sm:$0xff] %v1135
        %s1138 = sand.u32 %s115, 1
        %s1139 = scalar_lea.sflag [#allocation3], %s1138
        %s1140 = sand.u32 %s115, 1
        %s1141 = smul.addr %s1140, 16
        %s1142 = scalar_lea.vmem [#allocation2], %s1141
        // Predicated region
        $region37: #{tpu_custom_call.1} parent=35 // pred_check
          %p1143 = pneg %p125
        $region38: #{tpu_custom_call.1} parent=35 // pred_check_branch
          %1145 = sbr.rel (%p1143) target = $region40
        $region39: #{tpu_custom_call.1} parent=35 // pred_region
          %s1147 = ssub.s32 256, 256
          %1148 = vsyncadd %s1139, %s1147
          %s1149 = smul.addr %s18, 2
          %s1150 = smul.addr %s1149, 128
          %s1151 = scalar_lea.hbm %s4, %s1150
          %s1153 = sshll.u32 %s1142, 4
          %s1154 = int_to_ptr.vmem [resolvable:$true] %s1153
          %1156 = dma.vmem_to_hbm [thread:$0]  %s1154, 256, %s1151, %s1139
        $region40: #{tpu_custom_call.1} parent=35 // pred_fallthru
          _
      $region36: #{tpu_custom_call.1} parent=5 // pred_fallthru
        _
      %p1157 = scmp.le.s32.totalorder 2, %s13
      // Predicated region
      $region41: #{tpu_custom_call.1} parent=5 // pred_check
        %p1158 = pneg %p1157
      $region42: #{tpu_custom_call.1} parent=5 // pred_check_branch
        %1160 = sbr.rel (%p1158) target = $region44
      $region43: #{tpu_custom_call.1} parent=5 // pred_region
        %s1161 = ssub.s32 %s13, 2
        // Predicated region
        $region45: #{tpu_custom_call.1} parent=43 // pred_check
          %p1162 = pneg %p131
        $region46: #{tpu_custom_call.1} parent=43 // pred_check_branch
          %1164 = sbr.rel (%p1162) target = $region48
        $region47: #{tpu_custom_call.1} parent=43 // pred_region
          %s1165 = sand.u32 %s116, 1
          %s1166 = scalar_lea.sflag [#allocation3], %s1165
          %s1167 = sand.u32 %s116, 1
          %s1168 = smul.addr %s1167, 16
          %s1169 = scalar_lea.vmem [#allocation2], %s1168
          %1170 = dma.done %s1166, 256
        $region48: #{tpu_custom_call.1} parent=43 // pred_fallthru
          _
      $region44: #{tpu_custom_call.1} parent=5 // pred_fallthru
        _
    $region6: #{tpu_custom_call.1} parent=1 // loop_footer
      %s17 = sadd.s32 1, %s13
    $region7: #{tpu_custom_call.1} parent=1 // loop_footer_branch
      %12 = sbr.rel target = $region3
    $region8: #{tpu_custom_call.1} parent=1 // loop_exit
      _
    %1171 = vsyncpa [#allocation3], 1
    %s1172 = scalar_lea.sflag [#allocation3], 1
    %1173 = vsyncpa %s1172, 1

</llo_original>
